<compile_context>
chip_gen: v7x
topology: tpu7x:2x2x1
jax: 0.10.0
libtpu: 0.0.40
codegen_flags: <defaults>
</compile_context>

<pallas_src>
import jax
import jax.numpy as jnp
from jax import lax
from jax.experimental import pallas as pl
from jax.experimental.pallas import tpu as pltpu


def _linear_kernel(x_ref, w_ref, b_ref, o_ref):
    # x_ref: [tile_m, K], w_ref: [N, K] (native torch layout), b_ref: [1, N]
    acc = lax.dot_general(
        x_ref[...], w_ref[...],
        dimension_numbers=(((1,), (1,)), ((), ())),  # contract x.K with w.K (trans_b)
        preferred_element_type=jnp.float32,
    )
    o_ref[...] = (acc + b_ref[...]).astype(o_ref.dtype)


def _round_up(x, m):
    return ((x + m - 1) // m) * m


def vlayer26_forward(x, weight, bias, *, tile_m=None):
    """x: [..., 1024], weight: [2, 1024] (PyTorch layout), bias: [2]."""
    orig_shape = x.shape
    K = orig_shape[-1]
    N, K2 = weight.shape
    assert K == K2 == 1024 and N == 2

    x2d = x.reshape(-1, K)
    M = x2d.shape[0]

    if tile_m is None:
        # Large tiles amortize per-grid-step overhead and keep DMAs near the
        # HBM roofline; single padded step for tiny M; 1024 cap keeps the
        # double-buffered footprint inside every chip's default scoped VMEM.
        tile_m = min(_round_up(M, 8), 1024)
    assert tile_m % 8 == 0, "tile_m must be a multiple of 8 (f32 sublane tiling)"

    b = bias.astype(x.dtype).reshape(1, N)
    grid = (pl.cdiv(M, tile_m),)

    itemsize = jnp.dtype(x.dtype).itemsize
    cost = pl.CostEstimate(
        flops=2 * M * K * N,
        transcendentals=0,
        bytes_accessed=(M * K + N * K + N + M * N) * itemsize,
    )

    out2d = pl.pallas_call(
        _linear_kernel,
        out_shape=jax.ShapeDtypeStruct((M, N), x.dtype),
        grid_spec=pltpu.PrefetchScalarGridSpec(
            num_scalar_prefetch=0,
            grid=grid,
            in_specs=[
                pl.BlockSpec((tile_m, K), lambda i: (i, 0)),  # x tile (pipelined)
                pl.BlockSpec((N, K), lambda i: (0, 0)),       # full weight, lane-dense, resident
                pl.BlockSpec((1, N), lambda i: (0, 0)),       # bias, resident
            ],
            out_specs=pl.BlockSpec((tile_m, N), lambda i: (i, 0)),
        ),
        compiler_params=pltpu.CompilerParams(
            dimension_semantics=("parallel",),   # shard M across TCs on v7x
            vmem_limit_bytes=32 << 20,           # headroom; safe on all chips
        ),
        cost_estimate=cost,
    )(x2d, weight, b)

    return out2d.reshape(*orig_shape[:-1], N)


if __name__ == "__main__":
    key = jax.random.PRNGKey(0)
    k_x, k_w = jax.random.split(key)

    # Small token count; hidden size fixed at 1024 by the module definition.
    batch, seq, hidden, n_out = 2, 8, 1024, 2
    initializer_range = 0.02

    x = jax.random.normal(k_x, (batch, seq, hidden), dtype=jnp.float32)
    # init_bert_weights: weight ~ N(0, initializer_range), bias = 0
    weight = initializer_range * jax.random.normal(
        k_w, (n_out, hidden), dtype=jnp.float32)
    bias = jnp.zeros((n_out,), dtype=jnp.float32)

    out = vlayer26_forward(x, weight, bias)
    jax.block_until_ready(out)

    # Reference check (plain JAX)
    ref = x @ weight.T + bias
    assert out.shape == (batch, seq, n_out)
    assert jnp.allclose(out, ref, atol=1e-4, rtol=1e-4)
    print("KERNEL_OK")
</pallas_src>

<mosaic_0001>
module attributes {stable_mosaic.version = 11 : i64} {
  func.func @_linear_kernel(%arg0: i32, %arg1: memref<16x1024xf32, #tpu.memory_space<vmem>>, %arg2: memref<2x1024xf32, #tpu.memory_space<vmem>>, %arg3: memref<1x2xf32, #tpu.memory_space<vmem>>, %arg4: memref<16x2xf32, #tpu.memory_space<vmem>>) attributes {dimension_semantics = [#tpu.dimension_semantics<parallel>], iteration_bounds = array<i64: 1>, scalar_prefetch = 0 : i64, scratch_operands = 0 : i64, tpu.core_type = #tpu.core_type<tc>, window_params = [{transform_indices = @transform_0, window_bounds = array<i64: 16, 1024>}, {pipeline_mode = #tpu.pipeline_mode<synchronous>, transform_indices = @transform_1, window_bounds = array<i64: 2, 1024>}, {pipeline_mode = #tpu.pipeline_mode<synchronous>, transform_indices = @transform_2, window_bounds = array<i64: 1, 2>}, {transform_indices = @transform_3, window_bounds = array<i64: 16, 2>}]} {
    %c0 = arith.constant 0 : index
    %c0_0 = arith.constant 0 : index
    %0 = vector.load %arg1[%c0, %c0_0] : memref<16x1024xf32, #tpu.memory_space<vmem>>, vector<16x1024xf32>
    %c0_1 = arith.constant 0 : index
    %c0_2 = arith.constant 0 : index
    %1 = vector.load %arg2[%c0_1, %c0_2] : memref<2x1024xf32, #tpu.memory_space<vmem>>, vector<2x1024xf32>
    %cst = arith.constant dense<0.000000e+00> : vector<16x2xf32>
    %2 = tpu.matmul %0, %1, %cst {dimension_numbers = #tpu.dot_dimension_numbers<[1], [1], [0], [0], [0, 0, 1, 0], [], []>} : vector<16x1024xf32>, vector<2x1024xf32>, vector<16x2xf32> -> vector<16x2xf32>
    %c0_3 = arith.constant 0 : index
    %c0_4 = arith.constant 0 : index
    %3 = vector.load %arg3[%c0_3, %c0_4] : memref<1x2xf32, #tpu.memory_space<vmem>>, vector<1x2xf32>
    %4 = vector.broadcast %3 : vector<1x2xf32> to vector<16x2xf32>
    %5 = arith.addf %2, %4 : vector<16x2xf32>
    %c0_5 = arith.constant 0 : index
    %c0_6 = arith.constant 0 : index
    %6 = vector.load %arg4[%c0_5, %c0_6] : memref<16x2xf32, #tpu.memory_space<vmem>>, vector<16x2xf32>
    tpu.vector_store %arg4[%c0_5, %c0_6], %5 {strides = array<i32>} : memref<16x2xf32, #tpu.memory_space<vmem>>, vector<16x2xf32>,
    return
  }
  func.func @transform_0(%arg0: i32) -> (i32, i32) {
    %c0_i32 = arith.constant 0 : i32
    %c0_i32_0 = arith.constant 0 : i32
    return %arg0, %c0_i32 : i32, i32
  }
  func.func @transform_1(%arg0: i32) -> (i32, i32) {
    %c0_i32 = arith.constant 0 : i32
    %c0_i32_0 = arith.constant 0 : i32
    %c0_i32_1 = arith.constant 0 : i32
    return %c0_i32, %c0_i32_0 : i32, i32
  }
  func.func @transform_2(%arg0: i32) -> (i32, i32) {
    %c0_i32 = arith.constant 0 : i32
    %c0_i32_0 = arith.constant 0 : i32
    %c0_i32_1 = arith.constant 0 : i32
    return %c0_i32, %c0_i32_0 : i32, i32
  }
  func.func @transform_3(%arg0: i32) -> (i32, i32) {
    %c0_i32 = arith.constant 0 : i32
    %c0_i32_0 = arith.constant 0 : i32
    return %arg0, %c0_i32 : i32, i32
  }
}

</mosaic_0001>

<llo_original>
// kernel: tpu_custom_call.1
$region0: #{tpu_custom_call.1}
  #allocation0 [shape = 'u32[]', space=smem, size = 0x4, offset = 0x4, fixed_abs, tag = 'smem constant byte address 0x4 - core index']
  #allocation1 [shape = 'u32[144,128]{1,0:T(1,128)}', space=vmem, size = 0x12000, scoped, tag = 'internal scratch']
  %s0 = inlined_call_operand.hbm [shape: f32[16,1024], index: 0, kind: input, shape index: {}]
  %s1 = inlined_call_operand.hbm [shape: f32[2,1024], index: 1, kind: input, shape index: {}]
  %s2 = inlined_call_operand.vmem [shape: f32[1,2], index: 2, kind: input, shape index: {}]
  %s3 = inlined_call_operand.vmem [shape: f32[16,2], index: 3, kind: output, shape index: {}]
  %s4 = sld [smem:[#allocation0]]
  $region30: #{tpu_custom_call.1} parent=0
    _
  %s6 = ssub.s32 1, %s4
  %s7 = scalar_select 0, %s6, %s4
  $region1: #{tpu_custom_call.1} parent=0
    #allocation2 [shape = 'u8[65536]{0}', space=vmem, size = 0x10000, scoped, tag = 'input window, operand 0, single buffered']
    #allocation3 [shape = 's32[1]{0}', space=sflag, size = 0x4, scoped, tag = 'scoped memory for tpu_custom_call.1']
    #allocation4 [shape = 'u8[8192]{0}', space=vmem, size = 0x2000, scoped, tag = 'input window, operand 1, single buffered']
    #allocation5 [shape = 's32[1]{0}', space=sflag, size = 0x4, scoped, tag = 'scoped memory for tpu_custom_call.1']
    %8 = vsyncpa [#allocation3], 0
    %9 = vsyncpa [#allocation5], 0
    // Predicated region
    $region2: #{tpu_custom_call.1} parent=1 // pred_check
      _
    $region3: #{tpu_custom_call.1} parent=1 // pred_check_branch
      %11 = sbr.rel (0) target = $region5
    $region4: #{tpu_custom_call.1} parent=1 // pred_region
      %s13 = ssub.s32 2048, 2048
      %14 = vsyncadd [#allocation3], %s13
      %s15 = sshll.u32 [#allocation2], 4
      %s16 = int_to_ptr.vmem [resolvable:$true] %s15
      %21 = dma.hbm_to_vmem [thread:$0]  %s0, 2048, %s16, [#allocation3], 1024, 1024, 64
    $region5: #{tpu_custom_call.1} parent=1 // pred_fallthru
      _
    // Predicated region
    $region6: #{tpu_custom_call.1} parent=1 // pred_check
      _
    $region7: #{tpu_custom_call.1} parent=1 // pred_check_branch
      %23 = sbr.rel (0) target = $region9
    $region8: #{tpu_custom_call.1} parent=1 // pred_region
      %s25 = ssub.s32 256, 256
      %26 = vsyncadd [#allocation5], %s25
      %s28 = sshll.u32 [#allocation4], 4
      %s29 = int_to_ptr.vmem [resolvable:$true] %s28
      %31 = dma.hbm_to_vmem [thread:$0]  %s1, 256, %s29, [#allocation5]
    $region9: #{tpu_custom_call.1} parent=1 // pred_fallthru
      _
    // Predicated region
    $region10: #{tpu_custom_call.1} parent=1 // pred_check
      _
    $region11: #{tpu_custom_call.1} parent=1 // pred_check_branch
      %33 = sbr.rel (0) target = $region13
    $region12: #{tpu_custom_call.1} parent=1 // pred_region
      _
    $region13: #{tpu_custom_call.1} parent=1 // pred_fallthru
      _
    // Predicated region
    $region14: #{tpu_custom_call.1} parent=1 // pred_check
      _
    $region15: #{tpu_custom_call.1} parent=1 // pred_check_branch
      %35 = sbr.rel (0) target = $region17
    $region16: #{tpu_custom_call.1} parent=1 // pred_region
      %36 = dma.done [#allocation3], 2048
    $region17: #{tpu_custom_call.1} parent=1 // pred_fallthru
      _
    // Predicated region
    $region18: #{tpu_custom_call.1} parent=1 // pred_check
      _
    $region19: #{tpu_custom_call.1} parent=1 // pred_check_branch
      %38 = sbr.rel (0) target = $region21
    $region20: #{tpu_custom_call.1} parent=1 // pred_region
      %39 = dma.done [#allocation5], 256
    $region21: #{tpu_custom_call.1} parent=1 // pred_fallthru
      _
    %v40 = vld [vmem:[#allocation2] sm:$0xff]
    %v41 = vld [vmem:[#allocation2 + $0x8] sm:$0xff]
    %v42 = vld [vmem:[#allocation2 + $0x10] sm:$0xff]
    %v43 = vld [vmem:[#allocation2 + $0x18] sm:$0xff]
    %v44 = vld [vmem:[#allocation2 + $0x20] sm:$0xff]
    %v45 = vld [vmem:[#allocation2 + $0x28] sm:$0xff]
    %v46 = vld [vmem:[#allocation2 + $0x30] sm:$0xff]
    %v47 = vld [vmem:[#allocation2 + $0x38] sm:$0xff]
    %v48 = vld [vmem:[#allocation2 + $0x40] sm:$0xff]
    %v49 = vld [vmem:[#allocation2 + $0x48] sm:$0xff]
    %v50 = vld [vmem:[#allocation2 + $0x50] sm:$0xff]
    %v51 = vld [vmem:[#allocation2 + $0x58] sm:$0xff]
    %v52 = vld [vmem:[#allocation2 + $0x60] sm:$0xff]
    %v53 = vld [vmem:[#allocation2 + $0x68] sm:$0xff]
    %v54 = vld [vmem:[#allocation2 + $0x70] sm:$0xff]
    %v55 = vld [vmem:[#allocation2 + $0x78] sm:$0xff]
    %v56 = vld [vmem:[#allocation4] sm:$0xff]
    %v57 = vld [vmem:[#allocation4 + $0x8] sm:$0xff]
    %v58 = vld [vmem:[%s2] sm:$0x1]
    %v60 = vlaneseq
    %v61 = vshrl.u32 %v60, 7
    %v62 = vsub.s32 0, %v61
    %v63 = vrot.slane %v58, %v62
    %v67 = vcombine.high %v56, %v56
    %v69 = vunpack.c.l.s4 1983009808
    %v70 = vunpack.c.0.s8 %v69
    %v71 = vlaneseq
    %v72 = vshrl.u32 %v71, 7
    %v73 = vsub.s32 %v70, %v72
    %v74 = vrot.slane %v56, %v73
    %v76 = vunpack.c.l.s4 1983009808
    %v77 = vunpack.c.0.s8 %v76
    %v78 = vlaneseq
    %v79 = vshrl.u32 %v78, 7
    %v80 = vsub.s32 %v77, %v79
    %v81 = vrot.slane %v67, %v80
    %v82 = vcombine.high %v74, %v74
    %v83 = vcombine.high %v81, %v81
    %v84 = vcombine.high %v57, %v57
    %v86 = vunpack.c.l.s4 1983009808
    %v87 = vunpack.c.0.s8 %v86
    %v88 = vlaneseq
    %v89 = vshrl.u32 %v88, 7
    %v90 = vsub.s32 %v87, %v89
    %v91 = vrot.slane %v57, %v90
    %v93 = vunpack.c.l.s4 1983009808
    %v94 = vunpack.c.0.s8 %v93
    %v95 = vlaneseq
    %v96 = vshrl.u32 %v95, 7
    %v97 = vsub.s32 %v94, %v96
    %v98 = vrot.slane %v84, %v97
    %v99 = vcombine.high %v91, %v91
    %v100 = vcombine.high %v98, %v98
    %109 = vmatprep.subr.mxu0 %v82
    %110 = vmatpush1.xpose.msra.mxu0 %v74
    %111 = vmatprep.subr.mxu0 0.0
    %112 = vmatpush1.xpose.msra.mxu0 0.0
    %113 = vmatprep.subr.mxu0 0.0
    %114 = vmatpush1.xpose.msra.mxu0 0.0
    %115 = vmatprep.subr.mxu0 0.0
    %116 = vmatpush1.xpose.msra.mxu0 0.0
    %117 = vmatprep.subr.mxu0 0.0
    %118 = vmatpush1.xpose.msra.mxu0 0.0
    %119 = vmatprep.subr.mxu0 0.0
    %120 = vmatpush1.xpose.msra.mxu0 0.0
    %121 = vmatprep.subr.mxu0 0.0
    %122 = vmatpush1.xpose.msra.mxu0 0.0
    %123 = vmatprep.subr.mxu0 0.0
    %124 = vmatpush1.xpose.msra.mxu0 0.0
    %125 = vmatprep.subr.mxu0 0.0
    %126 = vmatpush1.xpose.msra.mxu0 0.0
    %127 = vmatprep.subr.mxu0 0.0
    %128 = vmatpush1.xpose.msra.mxu0 0.0
    %129 = vmatprep.subr.mxu0 0.0
    %130 = vmatpush1.xpose.msra.mxu0 0.0
    %131 = vmatprep.subr.mxu0 0.0
    %132 = vmatpush1.xpose.msra.mxu0 0.0
    %133 = vmatprep.subr.mxu0 0.0
    %134 = vmatpush1.xpose.msra.mxu0 0.0
    %135 = vmatprep.subr.mxu0 0.0
    %136 = vmatpush1.xpose.msra.mxu0 0.0
    %137 = vmatprep.subr.mxu0 0.0
    %138 = vmatpush1.xpose.msra.mxu0 0.0
    %139 = vmatprep.subr.mxu0 0.0
    %140 = vmatpush1.xpose.msra.mxu0 0.0
    %141 = vmatprep.subr.mxu0 0.0
    %142 = vmatpush1.xpose.msra.mxu0 0.0
    %143 = vmatprep.subr.mxu0 0.0
    %144 = vmatpush1.xpose.msra.mxu0 0.0
    %145 = vmatprep.subr.mxu0 0.0
    %146 = vmatpush1.xpose.msra.mxu0 0.0
    %147 = vmatprep.subr.mxu0 0.0
    %148 = vmatpush1.xpose.msra.mxu0 0.0
    %149 = vmatprep.subr.mxu0 0.0
    %150 = vmatpush1.xpose.msra.mxu0 0.0
    %151 = vmatprep.subr.mxu0 0.0
    %152 = vmatpush1.xpose.msra.mxu0 0.0
    %153 = vmatprep.subr.mxu0 0.0
    %154 = vmatpush1.xpose.msra.mxu0 0.0
    %155 = vmatprep.subr.mxu0 0.0
    %156 = vmatpush1.xpose.msra.mxu0 0.0
    %157 = vmatprep.subr.mxu0 0.0
    %158 = vmatpush1.xpose.msra.mxu0 0.0
    %159 = vmatprep.subr.mxu0 0.0
    %160 = vmatpush1.xpose.msra.mxu0 0.0
    %161 = vmatprep.subr.mxu0 0.0
    %162 = vmatpush1.xpose.msra.mxu0 0.0
    %163 = vmatprep.subr.mxu0 0.0
    %164 = vmatpush1.xpose.msra.mxu0 0.0
    %165 = vmatprep.subr.mxu0 0.0
    %166 = vmatpush1.xpose.msra.mxu0 0.0
    %167 = vmatprep.subr.mxu0 0.0
    %168 = vmatpush1.xpose.msra.mxu0 0.0
    %169 = vmatprep.subr.mxu0 0.0
    %170 = vmatpush1.xpose.msra.mxu0 0.0
    %171 = vmatprep.subr.mxu0 0.0
    %172 = vmatpush1.xpose.msra.mxu0 0.0
    %173 = vmatprep.mubr.f32.mxu0 %v41
    %174 = vmatmul.mubr.f32.gmra.mrb[0].mxu0 %v40
    %v175 = vpop.f32.mrb[0].mxu0
    %v176 = vadd.f32 %v63, %v175
    %v177 = vpop.f32.mrb[0].mxu0
    %178 = vmatprep.mubr.f32.mxu0 %v49
    %179 = vmatmul.mubr.f32.gmra.mrb[0].mxu0 %v48
    %v180 = vpop.f32.mrb[0].mxu0
    %v181 = vadd.f32 %v63, %v180
    %v182 = vpop.f32.mrb[0].mxu0
    %183 = vdwg.mxu0
    %184 = vmatprep.subr.mxu0 %v83
    %185 = vmatpush1.xpose.msra.mxu0 %v81
    %186 = vmatprep.subr.mxu0 0.0
    %187 = vmatpush1.xpose.msra.mxu0 0.0
    %188 = vmatprep.subr.mxu0 0.0
    %189 = vmatpush1.xpose.msra.mxu0 0.0
    %190 = vmatprep.subr.mxu0 0.0
    %191 = vmatpush1.xpose.msra.mxu0 0.0
    %192 = vmatprep.subr.mxu0 0.0
    %193 = vmatpush1.xpose.msra.mxu0 0.0
    %194 = vmatprep.subr.mxu0 0.0
    %195 = vmatpush1.xpose.msra.mxu0 0.0
    %196 = vmatprep.subr.mxu0 0.0
    %197 = vmatpush1.xpose.msra.mxu0 0.0
    %198 = vmatprep.subr.mxu0 0.0
    %199 = vmatpush1.xpose.msra.mxu0 0.0
    %200 = vmatprep.subr.mxu0 0.0
    %201 = vmatpush1.xpose.msra.mxu0 0.0
    %202 = vmatprep.subr.mxu0 0.0
    %203 = vmatpush1.xpose.msra.mxu0 0.0
    %204 = vmatprep.subr.mxu0 0.0
    %205 = vmatpush1.xpose.msra.mxu0 0.0
    %206 = vmatprep.subr.mxu0 0.0
    %207 = vmatpush1.xpose.msra.mxu0 0.0
    %208 = vmatprep.subr.mxu0 0.0
    %209 = vmatpush1.xpose.msra.mxu0 0.0
    %210 = vmatprep.subr.mxu0 0.0
    %211 = vmatpush1.xpose.msra.mxu0 0.0
    %212 = vmatprep.subr.mxu0 0.0
    %213 = vmatpush1.xpose.msra.mxu0 0.0
    %214 = vmatprep.subr.mxu0 0.0
    %215 = vmatpush1.xpose.msra.mxu0 0.0
    %216 = vmatprep.subr.mxu0 0.0
    %217 = vmatpush1.xpose.msra.mxu0 0.0
    %218 = vmatprep.subr.mxu0 0.0
    %219 = vmatpush1.xpose.msra.mxu0 0.0
    %220 = vmatprep.subr.mxu0 0.0
    %221 = vmatpush1.xpose.msra.mxu0 0.0
    %222 = vmatprep.subr.mxu0 0.0
    %223 = vmatpush1.xpose.msra.mxu0 0.0
    %224 = vmatprep.subr.mxu0 0.0
    %225 = vmatpush1.xpose.msra.mxu0 0.0
    %226 = vmatprep.subr.mxu0 0.0
    %227 = vmatpush1.xpose.msra.mxu0 0.0
    %228 = vmatprep.subr.mxu0 0.0
    %229 = vmatpush1.xpose.msra.mxu0 0.0
    %230 = vmatprep.subr.mxu0 0.0
    %231 = vmatpush1.xpose.msra.mxu0 0.0
    %232 = vmatprep.subr.mxu0 0.0
    %233 = vmatpush1.xpose.msra.mxu0 0.0
    %234 = vmatprep.subr.mxu0 0.0
    %235 = vmatpush1.xpose.msra.mxu0 0.0
    %236 = vmatprep.subr.mxu0 0.0
    %237 = vmatpush1.xpose.msra.mxu0 0.0
    %238 = vmatprep.subr.mxu0 0.0
    %239 = vmatpush1.xpose.msra.mxu0 0.0
    %240 = vmatprep.subr.mxu0 0.0
    %241 = vmatpush1.xpose.msra.mxu0 0.0
    %242 = vmatprep.subr.mxu0 0.0
    %243 = vmatpush1.xpose.msra.mxu0 0.0
    %244 = vmatprep.subr.mxu0 0.0
    %245 = vmatpush1.xpose.msra.mxu0 0.0
    %246 = vmatprep.subr.mxu0 0.0
    %247 = vmatpush1.xpose.msra.mxu0 0.0
    %248 = vmatprep.mubr.f32.mxu0 %v43
    %249 = vmatmul.mubr.f32.gmra.mrb[0].mxu0 %v42
    %v250 = vpop.f32.mrb[0].mxu0
    %v251 = vadd.f32 %v176, %v250
    %v252 = vpop.f32.mrb[0].mxu0
    %253 = vmatprep.mubr.f32.mxu0 %v51
    %254 = vmatmul.mubr.f32.gmra.mrb[0].mxu0 %v50
    %v255 = vpop.f32.mrb[0].mxu0
    %v256 = vadd.f32 %v181, %v255
    %v257 = vpop.f32.mrb[0].mxu0
    %258 = vdwg.mxu0
    %259 = vmatprep.subr.mxu0 %v99
    %260 = vmatpush1.xpose.msra.mxu0 %v91
    %261 = vmatprep.subr.mxu0 0.0
    %262 = vmatpush1.xpose.msra.mxu0 0.0
    %263 = vmatprep.subr.mxu0 0.0
    %264 = vmatpush1.xpose.msra.mxu0 0.0
    %265 = vmatprep.subr.mxu0 0.0
    %266 = vmatpush1.xpose.msra.mxu0 0.0
    %267 = vmatprep.subr.mxu0 0.0
    %268 = vmatpush1.xpose.msra.mxu0 0.0
    %269 = vmatprep.subr.mxu0 0.0
    %270 = vmatpush1.xpose.msra.mxu0 0.0
    %271 = vmatprep.subr.mxu0 0.0
    %272 = vmatpush1.xpose.msra.mxu0 0.0
    %273 = vmatprep.subr.mxu0 0.0
    %274 = vmatpush1.xpose.msra.mxu0 0.0
    %275 = vmatprep.subr.mxu0 0.0
    %276 = vmatpush1.xpose.msra.mxu0 0.0
    %277 = vmatprep.subr.mxu0 0.0
    %278 = vmatpush1.xpose.msra.mxu0 0.0
    %279 = vmatprep.subr.mxu0 0.0
    %280 = vmatpush1.xpose.msra.mxu0 0.0
    %281 = vmatprep.subr.mxu0 0.0
    %282 = vmatpush1.xpose.msra.mxu0 0.0
    %283 = vmatprep.subr.mxu0 0.0
    %284 = vmatpush1.xpose.msra.mxu0 0.0
    %285 = vmatprep.subr.mxu0 0.0
    %286 = vmatpush1.xpose.msra.mxu0 0.0
    %287 = vmatprep.subr.mxu0 0.0
    %288 = vmatpush1.xpose.msra.mxu0 0.0
    %289 = vmatprep.subr.mxu0 0.0
    %290 = vmatpush1.xpose.msra.mxu0 0.0
    %291 = vmatprep.subr.mxu0 0.0
    %292 = vmatpush1.xpose.msra.mxu0 0.0
    %293 = vmatprep.subr.mxu0 0.0
    %294 = vmatpush1.xpose.msra.mxu0 0.0
    %295 = vmatprep.subr.mxu0 0.0
    %296 = vmatpush1.xpose.msra.mxu0 0.0
    %297 = vmatprep.subr.mxu0 0.0
    %298 = vmatpush1.xpose.msra.mxu0 0.0
    %299 = vmatprep.subr.mxu0 0.0
    %300 = vmatpush1.xpose.msra.mxu0 0.0
    %301 = vmatprep.subr.mxu0 0.0
    %302 = vmatpush1.xpose.msra.mxu0 0.0
    %303 = vmatprep.subr.mxu0 0.0
    %304 = vmatpush1.xpose.msra.mxu0 0.0
    %305 = vmatprep.subr.mxu0 0.0
    %306 = vmatpush1.xpose.msra.mxu0 0.0
    %307 = vmatprep.subr.mxu0 0.0
    %308 = vmatpush1.xpose.msra.mxu0 0.0
    %309 = vmatprep.subr.mxu0 0.0
    %310 = vmatpush1.xpose.msra.mxu0 0.0
    %311 = vmatprep.subr.mxu0 0.0
    %312 = vmatpush1.xpose.msra.mxu0 0.0
    %313 = vmatprep.subr.mxu0 0.0
    %314 = vmatpush1.xpose.msra.mxu0 0.0
    %315 = vmatprep.subr.mxu0 0.0
    %316 = vmatpush1.xpose.msra.mxu0 0.0
    %317 = vmatprep.subr.mxu0 0.0
    %318 = vmatpush1.xpose.msra.mxu0 0.0
    %319 = vmatprep.subr.mxu0 0.0
    %320 = vmatpush1.xpose.msra.mxu0 0.0
    %321 = vmatprep.subr.mxu0 0.0
    %322 = vmatpush1.xpose.msra.mxu0 0.0
    %323 = vmatprep.mubr.f32.mxu0 %v45
    %324 = vmatmul.mubr.f32.gmra.mrb[0].mxu0 %v44
    %v325 = vpop.f32.mrb[0].mxu0
    %v326 = vadd.f32 %v251, %v325
    %v327 = vpop.f32.mrb[0].mxu0
    %328 = vmatprep.mubr.f32.mxu0 %v53
    %329 = vmatmul.mubr.f32.gmra.mrb[0].mxu0 %v52
    %v330 = vpop.f32.mrb[0].mxu0
    %v331 = vadd.f32 %v256, %v330
    %v332 = vpop.f32.mrb[0].mxu0
    %333 = vdwg.mxu0
    %334 = vmatprep.subr.mxu0 %v100
    %335 = vmatpush1.xpose.msra.mxu0 %v98
    %336 = vmatprep.subr.mxu0 0.0
    %337 = vmatpush1.xpose.msra.mxu0 0.0
    %338 = vmatprep.subr.mxu0 0.0
    %339 = vmatpush1.xpose.msra.mxu0 0.0
    %340 = vmatprep.subr.mxu0 0.0
    %341 = vmatpush1.xpose.msra.mxu0 0.0
    %342 = vmatprep.subr.mxu0 0.0
    %343 = vmatpush1.xpose.msra.mxu0 0.0
    %344 = vmatprep.subr.mxu0 0.0
    %345 = vmatpush1.xpose.msra.mxu0 0.0
    %346 = vmatprep.subr.mxu0 0.0
    %347 = vmatpush1.xpose.msra.mxu0 0.0
    %348 = vmatprep.subr.mxu0 0.0
    %349 = vmatpush1.xpose.msra.mxu0 0.0
    %350 = vmatprep.subr.mxu0 0.0
    %351 = vmatpush1.xpose.msra.mxu0 0.0
    %352 = vmatprep.subr.mxu0 0.0
    %353 = vmatpush1.xpose.msra.mxu0 0.0
    %354 = vmatprep.subr.mxu0 0.0
    %355 = vmatpush1.xpose.msra.mxu0 0.0
    %356 = vmatprep.subr.mxu0 0.0
    %357 = vmatpush1.xpose.msra.mxu0 0.0
    %358 = vmatprep.subr.mxu0 0.0
    %359 = vmatpush1.xpose.msra.mxu0 0.0
    %360 = vmatprep.subr.mxu0 0.0
    %361 = vmatpush1.xpose.msra.mxu0 0.0
    %362 = vmatprep.subr.mxu0 0.0
    %363 = vmatpush1.xpose.msra.mxu0 0.0
    %364 = vmatprep.subr.mxu0 0.0
    %365 = vmatpush1.xpose.msra.mxu0 0.0
    %366 = vmatprep.subr.mxu0 0.0
    %367 = vmatpush1.xpose.msra.mxu0 0.0
    %368 = vmatprep.subr.mxu0 0.0
    %369 = vmatpush1.xpose.msra.mxu0 0.0
    %370 = vmatprep.subr.mxu0 0.0
    %371 = vmatpush1.xpose.msra.mxu0 0.0
    %372 = vmatprep.subr.mxu0 0.0
    %373 = vmatpush1.xpose.msra.mxu0 0.0
    %374 = vmatprep.subr.mxu0 0.0
    %375 = vmatpush1.xpose.msra.mxu0 0.0
    %376 = vmatprep.subr.mxu0 0.0
    %377 = vmatpush1.xpose.msra.mxu0 0.0
    %378 = vmatprep.subr.mxu0 0.0
    %379 = vmatpush1.xpose.msra.mxu0 0.0
    %380 = vmatprep.subr.mxu0 0.0
    %381 = vmatpush1.xpose.msra.mxu0 0.0
    %382 = vmatprep.subr.mxu0 0.0
    %383 = vmatpush1.xpose.msra.mxu0 0.0
    %384 = vmatprep.subr.mxu0 0.0
    %385 = vmatpush1.xpose.msra.mxu0 0.0
    %386 = vmatprep.subr.mxu0 0.0
    %387 = vmatpush1.xpose.msra.mxu0 0.0
    %388 = vmatprep.subr.mxu0 0.0
    %389 = vmatpush1.xpose.msra.mxu0 0.0
    %390 = vmatprep.subr.mxu0 0.0
    %391 = vmatpush1.xpose.msra.mxu0 0.0
    %392 = vmatprep.subr.mxu0 0.0
    %393 = vmatpush1.xpose.msra.mxu0 0.0
    %394 = vmatprep.subr.mxu0 0.0
    %395 = vmatpush1.xpose.msra.mxu0 0.0
    %396 = vmatprep.subr.mxu0 0.0
    %397 = vmatpush1.xpose.msra.mxu0 0.0
    %398 = vmatprep.mubr.f32.mxu0 %v47
    %399 = vmatmul.mubr.f32.gmra.mrb[0].mxu0 %v46
    %v400 = vpop.f32.mrb[0].mxu0
    %v401 = vadd.f32 %v326, %v400
    %v402 = vpop.f32.mrb[0].mxu0
    %403 = vmatprep.mubr.f32.mxu0 %v55
    %404 = vmatmul.mubr.f32.gmra.mrb[0].mxu0 %v54
    %v405 = vpop.f32.mrb[0].mxu0
    %v406 = vadd.f32 %v331, %v405
    %v407 = vpop.f32.mrb[0].mxu0
    %408 = vdwg.mxu0
    %vm409 = vcmask 15360
    %410 = vst.msk [vmem:[%s3] sm:$0xff] %vm409, %v401
    %411 = vst.msk [vmem:[%s3 + $0x8] sm:$0xff] %vm409, %v406
    // Predicated region
    $region22: #{tpu_custom_call.1} parent=1 // pred_check
      _
    $region23: #{tpu_custom_call.1} parent=1 // pred_check_branch
      %413 = sbr.rel (0) target = $region25
    $region24: #{tpu_custom_call.1} parent=1 // pred_region
      _
    $region25: #{tpu_custom_call.1} parent=1 // pred_fallthru
      _
    // Predicated region
    $region26: #{tpu_custom_call.1} parent=1 // pred_check
      _
    $region27: #{tpu_custom_call.1} parent=1 // pred_check_branch
      %415 = sbr.rel (0) target = $region29
    $region28: #{tpu_custom_call.1} parent=1 // pred_region
      _
    $region29: #{tpu_custom_call.1} parent=1 // pred_fallthru
      _
    %416 = vsyncpa [#allocation3], 1
    %417 = vsyncpa [#allocation5], 1

</llo_original>
